<compile_context>
chip_gen: v7x
topology: tpu7x:2x2x1
jax: 0.10.0
libtpu: 0.0.40
codegen_flags: <defaults>
</compile_context>

<pallas_src>
import jax
import jax.numpy as jnp
from jax.experimental import pallas as pl
from jax.experimental.pallas import tpu as pltpu

K_ELEMENTS = 3      # number of optical elements in the CompositeModel
_LANE = 128


def _round_up(x, m):
    return ((x + m - 1) // m) * m


def _pick_thw(HW, tm, D, det_bytes_per_elem, budget_bytes):
    """Largest 128-multiple divisor of HW whose pipelined blocks fit budget."""
    if HW % _LANE == 0:
        n128 = HW // _LANE
        for mult in range(n128, 0, -1):
            if n128 % mult != 0:
                continue
            thw = mult * _LANE
            # double-buffered field blocks (fr + fi) + double-buffered det block
            need = 2 * (2 * tm * thw * 4) + 2 * thw * D * det_bytes_per_elem
            if need <= budget_bytes:
                return thw
    # Fallback: single reduction step over the full spatial extent.
    return HW


def hybrid_kernel(fr_ref, fi_ref, det_ref, w1_ref, b1_ref, w2_ref, b2_ref,
                  out_ref, acc_ref):
    """One (batch-tile i, HW-tile k) grid step of the fused forward."""
    k = pl.program_id(1)

    @pl.when(k == 0)
    def _init():
        acc_ref[...] = jnp.zeros_like(acc_ref)

    # ---- optical model + detectors ------------------------------------------
    # Mask magnitude is already folded into det rows (|f*m|^2 = |f|^2 * |m|^2),
    # so the kernel only needs the field intensity.
    fr = fr_ref[...]                       # (TM, THW) f32
    fi = fi_ref[...]
    intensity = fr * fr + fi * fi          # (TM, THW) f32

    # Detector integration on the MXU; f32 accumulation in VMEM scratch.
    acc_ref[...] += jnp.dot(intensity.astype(det_ref.dtype), det_ref[...],
                            preferred_element_type=jnp.float32)

    # ---- electronic model: tiny MLP, applied once per batch tile ------------
    @pl.when(k == pl.num_programs(1) - 1)
    def _finalize():
        signals = acc_ref[...]                                   # (TM, D)
        h = jnp.dot(signals, w1_ref[...],
                    preferred_element_type=jnp.float32) + b1_ref[...]
        h = jnp.maximum(h, 0.0)
        out = jnp.dot(h, w2_ref[...],
                      preferred_element_type=jnp.float32) + b2_ref[...]
        out_ref[...] = out.astype(out_ref.dtype)                 # (TM, CP)


def hybrid_forward(field_re, field_im, mask_re, mask_im, det, w1, b1, w2, b2,
                   *, tm=256, vmem_budget_mb=40,
                   matmul_dtype=jnp.bfloat16):
    """Fused HybridModel forward.

    field_*: (B, HW), mask_*: (K, HW), det: (HW, D), w1: (D, HID),
    b1: (1, HID), w2: (HID, C), b2: (1, C).

    tm: batch tile (use 128 on v5e, 256 on v6e/v7x).
    vmem_budget_mb: VMEM budget used to pick the HW tile (40 is v7x-safe with
        64 MiB physical VMEM; ~96 is fine on v5e/v6e with 128 MiB).
    matmul_dtype: dtype of the detector-matmul inputs (bf16 is MXU-native on
        all generations; pass jnp.float32 for tight-tolerance testing).
    """
    B, HW = field_re.shape
    D, HID = w1.shape
    C = w2.shape[1]

    # 1) Fold the optical masks into the detector rows (exact for point-wise
    #    masks): |f * m1 * ... * mK|^2 = |f|^2 * prod_k |m_k|^2.
    msq = jnp.prod(mask_re.astype(jnp.float32) ** 2
                   + mask_im.astype(jnp.float32) ** 2, axis=0)    # (HW,)
    det_eff = (det * msq[:, None]).astype(matmul_dtype)           # (HW, D)
    det_bytes_per_elem = jnp.dtype(matmul_dtype).itemsize

    # 2) Batch tiling: dense sublanes, and >= 2 tiles when possible so the
    #    "parallel" batch axis feeds both v7x TensorCores.
    BP0 = _round_up(max(B, 8), 8)
    tm_eff = _round_up(min(tm, BP0), 8)
    if BP0 // tm_eff < 2 and BP0 >= 16:
        tm_eff = max(8, _round_up(BP0 // 2, 8))
    BP = _round_up(BP0, tm_eff)

    # 3) HW (reduction) tile: largest 128-multiple divisor of HW fitting VMEM.
    budget_bytes = int(vmem_budget_mb) << 20
    THW = _pick_thw(HW, tm_eff, D, det_bytes_per_elem, budget_bytes)

    # 4) Pad only what needs it: fields to (BP, HW); MLP widths to lane-dense
    #    128 so the final HBM store is an unmasked vst.  D stays unpadded.
    HIDP = _round_up(HID, _LANE)
    CP = _round_up(C, _LANE)

    def pad2(x, r, c):
        return jnp.pad(x, ((0, r - x.shape[0]), (0, c - x.shape[1])))

    frp = pad2(field_re, BP, HW)
    fip = pad2(field_im, BP, HW)
    w1p = pad2(w1, D, HIDP)
    b1p = pad2(b1.reshape(1, -1), 1, HIDP)
    w2p = pad2(w2, HIDP, CP)
    b2p = pad2(b2.reshape(1, -1), 1, CP)

    n_batch_tiles = BP // tm_eff
    grid = (n_batch_tiles, HW // THW)

    flops = (3 * BP * HW               # intensity
             + 2 * BP * HW * D         # detector matmul
             + 2 * BP * D * HIDP + 2 * BP * HIDP * CP)
    bytes_accessed = (4 * 2 * BP * HW                               # fields
                      + det_bytes_per_elem * HW * D * n_batch_tiles  # det re-read/tile
                      + 4 * (D * HIDP + HIDP + HIDP * CP + CP) * n_batch_tiles
                      + 4 * BP * CP)

    weights_bytes = 4 * (D * HIDP + HIDP + HIDP * CP + CP)
    pipeline_bytes = (2 * (2 * tm_eff * THW * 4)               # fr+fi dbl-buffered
                      + 2 * THW * D * det_bytes_per_elem       # det dbl-buffered
                      + 2 * weights_bytes                      # resident weights
                      + 2 * tm_eff * CP * 4                    # output blocks
                      + tm_eff * _LANE * 4)                    # acc scratch (padded)
    vmem_limit = int(min(max(pipeline_bytes + (16 << 20), 32 << 20), 100 << 20))

    # NOTE: if profiling still shows exposed field/det DMA after retiling, add
    # pipeline_mode=pl.Buffered(3) on the field/det BlockSpecs.
    out_padded = pl.pallas_call(
        hybrid_kernel,
        out_shape=jax.ShapeDtypeStruct((BP, CP), jnp.float32),
        grid_spec=pltpu.PrefetchScalarGridSpec(
            num_scalar_prefetch=0,
            grid=grid,
            in_specs=[
                pl.BlockSpec((tm_eff, THW), lambda i, k: (i, k)),   # field real
                pl.BlockSpec((tm_eff, THW), lambda i, k: (i, k)),   # field imag
                pl.BlockSpec((THW, D), lambda i, k: (k, 0)),        # detectors (D unpadded)
                pl.BlockSpec((D, HIDP), lambda i, k: (0, 0)),       # w1
                pl.BlockSpec((1, HIDP), lambda i, k: (0, 0)),       # b1
                pl.BlockSpec((HIDP, CP), lambda i, k: (0, 0)),      # w2
                pl.BlockSpec((1, CP), lambda i, k: (0, 0)),         # b2
            ],
            out_specs=pl.BlockSpec((tm_eff, CP), lambda i, k: (i, 0)),
            scratch_shapes=[pltpu.VMEM((tm_eff, D), jnp.float32)],  # signal acc
        ),
        compiler_params=pltpu.CompilerParams(
            dimension_semantics=("parallel", "arbitrary"),
            vmem_limit_bytes=vmem_limit),
        cost_estimate=pl.CostEstimate(flops=int(flops), transcendentals=0,
                                      bytes_accessed=int(bytes_accessed)),
    )(frp, fip, det_eff, w1p, b1p, w2p, b2p)

    return out_padded[:B, :C]


def reference_forward(field_re, field_im, mask_re, mask_im, det, w1, b1, w2, b2):
    """Pure-JAX reference matching the PyTorch module semantics
    (full per-element complex multiplies, no folding)."""
    fr, fi = field_re, field_im
    for k in range(mask_re.shape[0]):
        mr, mi = mask_re[k:k + 1], mask_im[k:k + 1]
        fr, fi = fr * mr - fi * mi, fr * mi + fi * mr
    intensity = fr * fr + fi * fi
    signals = intensity @ det
    h = jnp.maximum(signals @ w1 + b1.reshape(1, -1), 0.0)
    return h @ w2 + b2.reshape(1, -1)


if __name__ == "__main__":
    # Small shapes consistent with the forward pass.
    B, H, W = 2, 16, 16          # batch, spatial field (B,1,H,W) -> (B, H*W)
    HW = H * W
    D = 8                        # number of detectors
    HID = 32                     # electronic hidden width
    C = 8                        # electronic output size

    key = jax.random.PRNGKey(0)
    ks = jax.random.split(key, 9)

    # input optical field (complex, carried as real/imag parts)
    field_re = jax.random.normal(ks[0], (B, HW), jnp.float32)
    field_im = jax.random.normal(ks[1], (B, HW), jnp.float32)

    # optical elements: NON-unit-modulus masks (amplitude * exp(i*phi)) so the
    # optical stage is exercised non-degenerately.
    phases = jax.random.uniform(ks[2], (K_ELEMENTS, HW), jnp.float32,
                                minval=0.0, maxval=2.0 * jnp.pi)
    amps = jax.random.uniform(ks[8], (K_ELEMENTS, HW), jnp.float32,
                              minval=0.5, maxval=1.5)
    mask_re = amps * jnp.cos(phases)
    mask_im = amps * jnp.sin(phases)

    # detectors: non-negative spatial integration masks (normalized by area)
    det = jax.random.uniform(ks[3], (HW, D), jnp.float32) * (1.0 / HW)

    # electronic model: Linear(D, HID) + ReLU + Linear(HID, C)
    w1 = jax.random.normal(ks[4], (D, HID), jnp.float32) * (1.0 / jnp.sqrt(D))
    b1 = jax.random.normal(ks[5], (1, HID), jnp.float32) * 0.01
    w2 = jax.random.normal(ks[6], (HID, C), jnp.float32) * (1.0 / jnp.sqrt(HID))
    b2 = jax.random.normal(ks[7], (1, C), jnp.float32) * 0.01

    ref = reference_forward(field_re, field_im, mask_re, mask_im, det,
                            w1, b1, w2, b2)

    # f32 matmul path: strict tolerance against the f32 reference.
    out_f32 = hybrid_forward(field_re, field_im, mask_re, mask_im, det,
                             w1, b1, w2, b2, matmul_dtype=jnp.float32)
    out_f32 = jax.block_until_ready(out_f32)
    assert out_f32.shape == (B, C)
    assert jnp.allclose(out_f32, ref, rtol=1e-4, atol=1e-4), \
        float(jnp.max(jnp.abs(out_f32 - ref)))

    # bf16 matmul path (performance default): loose tolerance.
    out_bf16 = hybrid_forward(field_re, field_im, mask_re, mask_im, det,
                              w1, b1, w2, b2, matmul_dtype=jnp.bfloat16)
    out_bf16 = jax.block_until_ready(out_bf16)
    assert out_bf16.shape == (B, C)
    assert jnp.allclose(out_bf16, ref, rtol=1e-1, atol=1e-1), \
        float(jnp.max(jnp.abs(out_bf16 - ref)))

    # TODO(synk): CompositeModel.volume/profile/planes and
    # HybridModel.visualize are host-side plotting/interpolation utilities
    # (matplotlib, tqdm) with no Pallas equivalent; only forward() is a kernel.
    print("KERNEL_OK")
</pallas_src>

<mosaic_0001>
module attributes {stable_mosaic.version = 11 : i64} {
  func.func @hybrid_kernel(%arg0: i32, %arg1: i32, %arg2: memref<8x256xf32, #tpu.memory_space<vmem>>, %arg3: memref<8x256xf32, #tpu.memory_space<vmem>>, %arg4: memref<256x8xf32, #tpu.memory_space<vmem>>, %arg5: memref<8x128xf32, #tpu.memory_space<vmem>>, %arg6: memref<1x128xf32, #tpu.memory_space<vmem>>, %arg7: memref<128x128xf32, #tpu.memory_space<vmem>>, %arg8: memref<1x128xf32, #tpu.memory_space<vmem>>, %arg9: memref<8x128xf32, #tpu.memory_space<vmem>>, %arg10: memref<8x8xf32, #tpu.memory_space<vmem>>) attributes {dimension_semantics = [#tpu.dimension_semantics<parallel>, #tpu.dimension_semantics<arbitrary>], iteration_bounds = array<i64: 1, 1>, scalar_prefetch = 0 : i64, scratch_operands = 1 : i64, tpu.core_type = #tpu.core_type<tc>, window_params = [{transform_indices = @transform_0, window_bounds = array<i64: 8, 256>}, {transform_indices = @transform_1, window_bounds = array<i64: 8, 256>}, {transform_indices = @transform_2, window_bounds = array<i64: 256, 8>}, {pipeline_mode = #tpu.pipeline_mode<synchronous>, transform_indices = @transform_3, window_bounds = array<i64: 8, 128>}, {pipeline_mode = #tpu.pipeline_mode<synchronous>, transform_indices = @transform_4, window_bounds = array<i64: 1, 128>}, {pipeline_mode = #tpu.pipeline_mode<synchronous>, transform_indices = @transform_5, window_bounds = array<i64: 128, 128>}, {pipeline_mode = #tpu.pipeline_mode<synchronous>, transform_indices = @transform_6, window_bounds = array<i64: 1, 128>}, {transform_indices = @transform_7, window_bounds = array<i64: 8, 128>}]} {
    %c0_i32 = arith.constant 0 : i32
    %0 = arith.cmpi eq, %arg1, %c0_i32 : i32
    %1 = arith.extui %0 : i1 to i32
    %c0_i32_0 = arith.constant 0 : i32
    %2 = arith.cmpi ne, %1, %c0_i32_0 : i32
    scf.if %2 {
      %cst_12 = arith.constant 0.000000e+00 : f32
      %16 = vector.broadcast %cst_12 : f32 to vector<8x8xf32>
      %c0_13 = arith.constant 0 : index
      %c0_14 = arith.constant 0 : index
      %17 = vector.load %arg10[%c0_13, %c0_14] : memref<8x8xf32, #tpu.memory_space<vmem>>, vector<8x8xf32>
      tpu.vector_store %arg10[%c0_13, %c0_14], %16 {strides = array<i32>} : memref<8x8xf32, #tpu.memory_space<vmem>>, vector<8x8xf32>,
    } else {
    }
    %c0 = arith.constant 0 : index
    %c0_1 = arith.constant 0 : index
    %3 = vector.load %arg2[%c0, %c0_1] : memref<8x256xf32, #tpu.memory_space<vmem>>, vector<8x256xf32>
    %c0_2 = arith.constant 0 : index
    %c0_3 = arith.constant 0 : index
    %4 = vector.load %arg3[%c0_2, %c0_3] : memref<8x256xf32, #tpu.memory_space<vmem>>, vector<8x256xf32>
    %5 = arith.mulf %3, %3 : vector<8x256xf32>
    %6 = arith.mulf %4, %4 : vector<8x256xf32>
    %7 = arith.addf %5, %6 : vector<8x256xf32>
    %c0_4 = arith.constant 0 : index
    %c0_5 = arith.constant 0 : index
    %8 = vector.load %arg10[%c0_4, %c0_5] : memref<8x8xf32, #tpu.memory_space<vmem>>, vector<8x8xf32>
    %c0_6 = arith.constant 0 : index
    %c0_7 = arith.constant 0 : index
    %9 = vector.load %arg4[%c0_6, %c0_7] : memref<256x8xf32, #tpu.memory_space<vmem>>, vector<256x8xf32>
    %cst = arith.constant dense<0.000000e+00> : vector<8x8xf32>
    %10 = tpu.matmul %7, %9, %cst {dimension_numbers = #tpu.dot_dimension_numbers<[1], [0], [0], [1], [0, 0, 1, 1], [], []>} : vector<8x256xf32>, vector<256x8xf32>, vector<8x8xf32> -> vector<8x8xf32>
    %11 = arith.addf %8, %10 : vector<8x8xf32>
    %c0_8 = arith.constant 0 : index
    %c0_9 = arith.constant 0 : index
    %12 = vector.load %arg10[%c0_8, %c0_9] : memref<8x8xf32, #tpu.memory_space<vmem>>, vector<8x8xf32>
    tpu.vector_store %arg10[%c0_8, %c0_9], %11 {strides = array<i32>} : memref<8x8xf32, #tpu.memory_space<vmem>>, vector<8x8xf32>,
    %c0_i32_10 = arith.constant 0 : i32
    %13 = arith.cmpi eq, %arg1, %c0_i32_10 : i32
    %14 = arith.extui %13 : i1 to i32
    %c0_i32_11 = arith.constant 0 : i32
    %15 = arith.cmpi ne, %14, %c0_i32_11 : i32
    scf.if %15 {
      %c0_12 = arith.constant 0 : index
      %c0_13 = arith.constant 0 : index
      %16 = vector.load %arg10[%c0_12, %c0_13] : memref<8x8xf32, #tpu.memory_space<vmem>>, vector<8x8xf32>
      %c0_14 = arith.constant 0 : index
      %c0_15 = arith.constant 0 : index
      %17 = vector.load %arg5[%c0_14, %c0_15] : memref<8x128xf32, #tpu.memory_space<vmem>>, vector<8x128xf32>
      %cst_16 = arith.constant dense<0.000000e+00> : vector<8x128xf32>
      %18 = tpu.matmul %16, %17, %cst_16 {dimension_numbers = #tpu.dot_dimension_numbers<[1], [0], [0], [1], [0, 0, 1, 1], [], []>} : vector<8x8xf32>, vector<8x128xf32>, vector<8x128xf32> -> vector<8x128xf32>
      %c0_17 = arith.constant 0 : index
      %c0_18 = arith.constant 0 : index
      %19 = vector.load %arg6[%c0_17, %c0_18] : memref<1x128xf32, #tpu.memory_space<vmem>>, vector<1x128xf32>
      %20 = vector.broadcast %19 : vector<1x128xf32> to vector<8x128xf32>
      %21 = arith.addf %18, %20 : vector<8x128xf32>
      %cst_19 = arith.constant 0.000000e+00 : f32
      %22 = vector.broadcast %cst_19 : f32 to vector<8x128xf32>
      %23 = arith.maximumf %21, %22 : vector<8x128xf32>
      %c0_20 = arith.constant 0 : index
      %c0_21 = arith.constant 0 : index
      %24 = vector.load %arg7[%c0_20, %c0_21] : memref<128x128xf32, #tpu.memory_space<vmem>>, vector<128x128xf32>
      %cst_22 = arith.constant dense<0.000000e+00> : vector<8x128xf32>
      %25 = tpu.matmul %23, %24, %cst_22 {dimension_numbers = #tpu.dot_dimension_numbers<[1], [0], [0], [1], [0, 0, 1, 1], [], []>} : vector<8x128xf32>, vector<128x128xf32>, vector<8x128xf32> -> vector<8x128xf32>
      %c0_23 = arith.constant 0 : index
      %c0_24 = arith.constant 0 : index
      %26 = vector.load %arg8[%c0_23, %c0_24] : memref<1x128xf32, #tpu.memory_space<vmem>>, vector<1x128xf32>
      %27 = vector.broadcast %26 : vector<1x128xf32> to vector<8x128xf32>
      %28 = arith.addf %25, %27 : vector<8x128xf32>
      %c0_25 = arith.constant 0 : index
      %c0_26 = arith.constant 0 : index
      %29 = vector.load %arg9[%c0_25, %c0_26] : memref<8x128xf32, #tpu.memory_space<vmem>>, vector<8x128xf32>
      tpu.vector_store %arg9[%c0_25, %c0_26], %28 {strides = array<i32>} : memref<8x128xf32, #tpu.memory_space<vmem>>, vector<8x128xf32>,
    } else {
    }
    return
  }
  func.func @transform_0(%arg0: i32, %arg1: i32) -> (i32, i32) {
    %c0_i32 = arith.constant 0 : i32
    return %arg0, %arg1 : i32, i32
  }
  func.func @transform_1(%arg0: i32, %arg1: i32) -> (i32, i32) {
    %c0_i32 = arith.constant 0 : i32
    return %arg0, %arg1 : i32, i32
  }
  func.func @transform_2(%arg0: i32, %arg1: i32) -> (i32, i32) {
    %c0_i32 = arith.constant 0 : i32
    %c0_i32_0 = arith.constant 0 : i32
    return %arg1, %c0_i32 : i32, i32
  }
  func.func @transform_3(%arg0: i32, %arg1: i32) -> (i32, i32) {
    %c0_i32 = arith.constant 0 : i32
    %c0_i32_0 = arith.constant 0 : i32
    %c0_i32_1 = arith.constant 0 : i32
    return %c0_i32, %c0_i32_0 : i32, i32
  }
  func.func @transform_4(%arg0: i32, %arg1: i32) -> (i32, i32) {
    %c0_i32 = arith.constant 0 : i32
    %c0_i32_0 = arith.constant 0 : i32
    %c0_i32_1 = arith.constant 0 : i32
    return %c0_i32, %c0_i32_0 : i32, i32
  }
  func.func @transform_5(%arg0: i32, %arg1: i32) -> (i32, i32) {
    %c0_i32 = arith.constant 0 : i32
    %c0_i32_0 = arith.constant 0 : i32
    %c0_i32_1 = arith.constant 0 : i32
    return %c0_i32, %c0_i32_0 : i32, i32
  }
  func.func @transform_6(%arg0: i32, %arg1: i32) -> (i32, i32) {
    %c0_i32 = arith.constant 0 : i32
    %c0_i32_0 = arith.constant 0 : i32
    %c0_i32_1 = arith.constant 0 : i32
    return %c0_i32, %c0_i32_0 : i32, i32
  }
  func.func @transform_7(%arg0: i32, %arg1: i32) -> (i32, i32) {
    %c0_i32 = arith.constant 0 : i32
    %c0_i32_0 = arith.constant 0 : i32
    return %arg0, %c0_i32 : i32, i32
  }
}

</mosaic_0001>

<llo_original>
// kernel: tpu_custom_call.1
$region0: #{tpu_custom_call.1}
  #allocation0 [shape = 'u32[]', space=smem, size = 0x4, offset = 0x4, fixed_abs, tag = 'smem constant byte address 0x4 - core index']
  #allocation1 [shape = 'u32[144,128]{1,0:T(1,128)}', space=vmem, size = 0x12000, scoped, tag = 'internal scratch']
  #allocation2 [shape = 'f32[8,8]{1,0:T(8,128)}', space=vmem, size = 0x1000, scoped, tag = 'scratch operand']
  %s0 = inlined_call_operand.vmem [shape: f32[8,256], index: 0, kind: input, shape index: {}]
  %s1 = inlined_call_operand.vmem [shape: f32[8,256], index: 1, kind: input, shape index: {}]
  %s2 = inlined_call_operand.vmem [shape: f32[256,8], index: 2, kind: input, shape index: {}]
  %s3 = inlined_call_operand.vmem [shape: f32[8,128], index: 3, kind: input, shape index: {}]
  %s4 = inlined_call_operand.vmem [shape: f32[1,128], index: 4, kind: input, shape index: {}]
  %s5 = inlined_call_operand.vmem [shape: f32[128,128], index: 5, kind: input, shape index: {}]
  %s6 = inlined_call_operand.vmem [shape: f32[1,128], index: 6, kind: input, shape index: {}]
  %s7 = inlined_call_operand.hbm [shape: f32[8,128], index: 7, kind: output, shape index: {}]
  %s8 = sld [smem:[#allocation0]]
  $region46: #{tpu_custom_call.1} parent=0
    _
  %s10 = ssub.s32 1, %s8
  %s11 = scalar_select 0, %s10, %s8
  $region1: #{tpu_custom_call.1} parent=0
    #allocation3 [shape = 'u8[4096]{0}', space=vmem, size = 0x1000, scoped, tag = 'output window, operand 0, single buffered']
    #allocation4 [shape = 's32[1]{0}', space=sflag, size = 0x4, scoped, tag = 'scoped memory for tpu_custom_call.1']
    %12 = vsyncpa [#allocation4], 0
    // Predicated region
    $region2: #{tpu_custom_call.1} parent=1 // pred_check
      _
    $region3: #{tpu_custom_call.1} parent=1 // pred_check_branch
      %14 = sbr.rel (0) target = $region5
    $region4: #{tpu_custom_call.1} parent=1 // pred_region
      _
    $region5: #{tpu_custom_call.1} parent=1 // pred_fallthru
      _
    // Predicated region
    $region6: #{tpu_custom_call.1} parent=1 // pred_check
      _
    $region7: #{tpu_custom_call.1} parent=1 // pred_check_branch
      %16 = sbr.rel (0) target = $region9
    $region8: #{tpu_custom_call.1} parent=1 // pred_region
      _
    $region9: #{tpu_custom_call.1} parent=1 // pred_fallthru
      _
    // Predicated region
    $region10: #{tpu_custom_call.1} parent=1 // pred_check
      _
    $region11: #{tpu_custom_call.1} parent=1 // pred_check_branch
      %18 = sbr.rel (0) target = $region13
    $region12: #{tpu_custom_call.1} parent=1 // pred_region
      _
    $region13: #{tpu_custom_call.1} parent=1 // pred_fallthru
      _
    // Predicated region
    $region14: #{tpu_custom_call.1} parent=1 // pred_check
      _
    $region15: #{tpu_custom_call.1} parent=1 // pred_check_branch
      %20 = sbr.rel (0) target = $region17
    $region16: #{tpu_custom_call.1} parent=1 // pred_region
      _
    $region17: #{tpu_custom_call.1} parent=1 // pred_fallthru
      _
    // Predicated region
    $region18: #{tpu_custom_call.1} parent=1 // pred_check
      _
    $region19: #{tpu_custom_call.1} parent=1 // pred_check_branch
      %22 = sbr.rel (0) target = $region21
    $region20: #{tpu_custom_call.1} parent=1 // pred_region
      _
    $region21: #{tpu_custom_call.1} parent=1 // pred_fallthru
      _
    // Predicated region
    $region22: #{tpu_custom_call.1} parent=1 // pred_check
      _
    $region23: #{tpu_custom_call.1} parent=1 // pred_check_branch
      %24 = sbr.rel (0) target = $region25
    $region24: #{tpu_custom_call.1} parent=1 // pred_region
      _
    $region25: #{tpu_custom_call.1} parent=1 // pred_fallthru
      _
    // Predicated region
    $region26: #{tpu_custom_call.1} parent=1 // pred_check
      _
    $region27: #{tpu_custom_call.1} parent=1 // pred_check_branch
      %26 = sbr.rel (0) target = $region29
    $region28: #{tpu_custom_call.1} parent=1 // pred_region
      _
    $region29: #{tpu_custom_call.1} parent=1 // pred_fallthru
      _
    %p27 = scmp.eq.s32.totalorder 0, 0
    // Predicated region
    $region30: #{tpu_custom_call.1} parent=1 // pred_check
      %p28 = pneg %p27
    $region31: #{tpu_custom_call.1} parent=1 // pred_check_branch
      %30 = sbr.rel (%p28) target = $region33
    $region32: #{tpu_custom_call.1} parent=1 // pred_region
      %vm31 = vcmask 64512
      %32 = vst.msk [vmem:[#allocation2] sm:$0xff] %vm31, 0.0
    $region33: #{tpu_custom_call.1} parent=1 // pred_fallthru
      _
    %v33 = vld [vmem:[%s0] sm:$0xff]
    %v34 = vld [vmem:[%s0 + $0x8] sm:$0xff]
    %v35 = vld [vmem:[%s1] sm:$0xff]
    %v36 = vld [vmem:[%s1 + $0x8] sm:$0xff]
    %v37 = vmul.f32 %v33, %v33
    %v38 = vmul.f32 %v34, %v34
    %v39 = vmul.f32 %v35, %v35
    %v40 = vmul.f32 %v36, %v36
    %v41 = vadd.f32 %v37, %v39
    %v42 = vadd.f32 %v38, %v40
    %v43 = vld [vmem:[#allocation2] sm:$0xff]
    %v44 = vld [vmem:[%s2] sm:$0xff]
    %v45 = vld [vmem:[%s2 + $0x8] sm:$0xff]
    %v46 = vld [vmem:[%s2 + $0x10] sm:$0xff]
    %v47 = vld [vmem:[%s2 + $0x18] sm:$0xff]
    %v48 = vld [vmem:[%s2 + $0x20] sm:$0xff]
    %v49 = vld [vmem:[%s2 + $0x28] sm:$0xff]
    %v50 = vld [vmem:[%s2 + $0x30] sm:$0xff]
    %v51 = vld [vmem:[%s2 + $0x38] sm:$0xff]
    %v52 = vld [vmem:[%s2 + $0x40] sm:$0xff]
    %v53 = vld [vmem:[%s2 + $0x48] sm:$0xff]
    %v54 = vld [vmem:[%s2 + $0x50] sm:$0xff]
    %v55 = vld [vmem:[%s2 + $0x58] sm:$0xff]
    %v56 = vld [vmem:[%s2 + $0x60] sm:$0xff]
    %v57 = vld [vmem:[%s2 + $0x68] sm:$0xff]
    %v58 = vld [vmem:[%s2 + $0x70] sm:$0xff]
    %v59 = vld [vmem:[%s2 + $0x78] sm:$0xff]
    %v60 = vld [vmem:[%s2 + $0x80] sm:$0xff]
    %v61 = vld [vmem:[%s2 + $0x88] sm:$0xff]
    %v62 = vld [vmem:[%s2 + $0x90] sm:$0xff]
    %v63 = vld [vmem:[%s2 + $0x98] sm:$0xff]
    %v64 = vld [vmem:[%s2 + $0xa0] sm:$0xff]
    %v65 = vld [vmem:[%s2 + $0xa8] sm:$0xff]
    %v66 = vld [vmem:[%s2 + $0xb0] sm:$0xff]
    %v67 = vld [vmem:[%s2 + $0xb8] sm:$0xff]
    %v68 = vld [vmem:[%s2 + $0xc0] sm:$0xff]
    %v69 = vld [vmem:[%s2 + $0xc8] sm:$0xff]
    %v70 = vld [vmem:[%s2 + $0xd0] sm:$0xff]
    %v71 = vld [vmem:[%s2 + $0xd8] sm:$0xff]
    %v72 = vld [vmem:[%s2 + $0xe0] sm:$0xff]
    %v73 = vld [vmem:[%s2 + $0xe8] sm:$0xff]
    %v74 = vld [vmem:[%s2 + $0xf0] sm:$0xff]
    %v75 = vld [vmem:[%s2 + $0xf8] sm:$0xff]
    %76 = vmatprep.subr.mxu0 0.0
    %77 = vmatpush1.msra.mxu0 %v44
    %78 = vmatprep.subr.mxu0 0.0
    %79 = vmatpush1.msra.mxu0 %v45
    %80 = vmatprep.subr.mxu0 0.0
    %81 = vmatpush1.msra.mxu0 %v46
    %82 = vmatprep.subr.mxu0 0.0
    %83 = vmatpush1.msra.mxu0 %v47
    %84 = vmatprep.subr.mxu0 0.0
    %85 = vmatpush1.msra.mxu0 %v48
    %86 = vmatprep.subr.mxu0 0.0
    %87 = vmatpush1.msra.mxu0 %v49
    %88 = vmatprep.subr.mxu0 0.0
    %89 = vmatpush1.msra.mxu0 %v50
    %90 = vmatprep.subr.mxu0 0.0
    %91 = vmatpush1.msra.mxu0 %v51
    %92 = vmatprep.subr.mxu0 0.0
    %93 = vmatpush1.msra.mxu0 %v52
    %94 = vmatprep.subr.mxu0 0.0
    %95 = vmatpush1.msra.mxu0 %v53
    %96 = vmatprep.subr.mxu0 0.0
    %97 = vmatpush1.msra.mxu0 %v54
    %98 = vmatprep.subr.mxu0 0.0
    %99 = vmatpush1.msra.mxu0 %v55
    %100 = vmatprep.subr.mxu0 0.0
    %101 = vmatpush1.msra.mxu0 %v56
    %102 = vmatprep.subr.mxu0 0.0
    %103 = vmatpush1.msra.mxu0 %v57
    %104 = vmatprep.subr.mxu0 0.0
    %105 = vmatpush1.msra.mxu0 %v58
    %106 = vmatprep.subr.mxu0 0.0
    %107 = vmatpush1.msra.mxu0 %v59
    %108 = vmatprep.subr.mxu0 0.0
    %109 = vmatpush1.msra.mxu0 %v60
    %110 = vmatprep.subr.mxu0 0.0
    %111 = vmatpush1.msra.mxu0 %v61
    %112 = vmatprep.subr.mxu0 0.0
    %113 = vmatpush1.msra.mxu0 %v62
    %114 = vmatprep.subr.mxu0 0.0
    %115 = vmatpush1.msra.mxu0 %v63
    %116 = vmatprep.subr.mxu0 0.0
    %117 = vmatpush1.msra.mxu0 %v64
    %118 = vmatprep.subr.mxu0 0.0
    %119 = vmatpush1.msra.mxu0 %v65
    %120 = vmatprep.subr.mxu0 0.0
    %121 = vmatpush1.msra.mxu0 %v66
    %122 = vmatprep.subr.mxu0 0.0
    %123 = vmatpush1.msra.mxu0 %v67
    %124 = vmatprep.subr.mxu0 0.0
    %125 = vmatpush1.msra.mxu0 %v68
    %126 = vmatprep.subr.mxu0 0.0
    %127 = vmatpush1.msra.mxu0 %v69
    %128 = vmatprep.subr.mxu0 0.0
    %129 = vmatpush1.msra.mxu0 %v70
    %130 = vmatprep.subr.mxu0 0.0
    %131 = vmatpush1.msra.mxu0 %v71
    %132 = vmatprep.subr.mxu0 0.0
    %133 = vmatpush1.msra.mxu0 %v72
    %134 = vmatprep.subr.mxu0 0.0
    %135 = vmatpush1.msra.mxu0 %v73
    %136 = vmatprep.subr.mxu0 0.0
    %137 = vmatpush1.msra.mxu0 %v74
    %138 = vmatprep.subr.mxu0 0.0
    %139 = vmatpush1.msra.mxu0 %v75
    %140 = vmatprep.mubr.f32.mxu0 %v42
    %141 = vmatmul.mubr.f32.gmra.mrb[0].mxu0 %v41
    %v142 = vpop.f32.mrb[0].mxu0
    %v143 = vadd.f32 0.0, %v142
    %v144 = vpop.f32.mrb[0].mxu0
    %145 = vdwg.mxu0
    %v146 = vadd.f32 %v43, %v143
    %vm147 = vcmask 64512
    %148 = vst.msk [vmem:[#allocation2] sm:$0xff] %vm147, %v146
    // Predicated region
    $region34: #{tpu_custom_call.1} parent=1 // pred_check
      %p149 = pneg %p27
    $region35: #{tpu_custom_call.1} parent=1 // pred_check_branch
      %151 = sbr.rel (%p149) target = $region37
    $region36: #{tpu_custom_call.1} parent=1 // pred_region
      %v152 = vld [vmem:[#allocation2] sm:$0xff]
      %v153 = vld [vmem:[%s3] sm:$0xff]
      %v154 = vld [vmem:[%s4] sm:$0x1]
      %v156 = vlaneseq
      %v157 = vshrl.u32 %v156, 7
      %v158 = vsub.s32 0, %v157
      %v159 = vrot.slane %v154, %v158
      %v162 = vsel %vm147, %v152, 0
      %164 = vmatprep.subr.mxu0 0.0
      %165 = vmatpush1.msra.mxu0 %v153
      %166 = vmatprep.subr.mxu0 0.0
      %167 = vmatpush1.msra.mxu0 0.0
      %168 = vmatprep.subr.mxu0 0.0
      %169 = vmatpush1.msra.mxu0 0.0
      %170 = vmatprep.subr.mxu0 0.0
      %171 = vmatpush1.msra.mxu0 0.0
      %172 = vmatprep.subr.mxu0 0.0
      %173 = vmatpush1.msra.mxu0 0.0
      %174 = vmatprep.subr.mxu0 0.0
      %175 = vmatpush1.msra.mxu0 0.0
      %176 = vmatprep.subr.mxu0 0.0
      %177 = vmatpush1.msra.mxu0 0.0
      %178 = vmatprep.subr.mxu0 0.0
      %179 = vmatpush1.msra.mxu0 0.0
      %180 = vmatprep.subr.mxu0 0.0
      %181 = vmatpush1.msra.mxu0 0.0
      %182 = vmatprep.subr.mxu0 0.0
      %183 = vmatpush1.msra.mxu0 0.0
      %184 = vmatprep.subr.mxu0 0.0
      %185 = vmatpush1.msra.mxu0 0.0
      %186 = vmatprep.subr.mxu0 0.0
      %187 = vmatpush1.msra.mxu0 0.0
      %188 = vmatprep.subr.mxu0 0.0
      %189 = vmatpush1.msra.mxu0 0.0
      %190 = vmatprep.subr.mxu0 0.0
      %191 = vmatpush1.msra.mxu0 0.0
      %192 = vmatprep.subr.mxu0 0.0
      %193 = vmatpush1.msra.mxu0 0.0
      %194 = vmatprep.subr.mxu0 0.0
      %195 = vmatpush1.msra.mxu0 0.0
      %196 = vmatprep.subr.mxu0 0.0
      %197 = vmatpush1.msra.mxu0 0.0
      %198 = vmatprep.subr.mxu0 0.0
      %199 = vmatpush1.msra.mxu0 0.0
      %200 = vmatprep.subr.mxu0 0.0
      %201 = vmatpush1.msra.mxu0 0.0
      %202 = vmatprep.subr.mxu0 0.0
      %203 = vmatpush1.msra.mxu0 0.0
      %204 = vmatprep.subr.mxu0 0.0
      %205 = vmatpush1.msra.mxu0 0.0
      %206 = vmatprep.subr.mxu0 0.0
      %207 = vmatpush1.msra.mxu0 0.0
      %208 = vmatprep.subr.mxu0 0.0
      %209 = vmatpush1.msra.mxu0 0.0
      %210 = vmatprep.subr.mxu0 0.0
      %211 = vmatpush1.msra.mxu0 0.0
      %212 = vmatprep.subr.mxu0 0.0
      %213 = vmatpush1.msra.mxu0 0.0
      %214 = vmatprep.subr.mxu0 0.0
      %215 = vmatpush1.msra.mxu0 0.0
      %216 = vmatprep.subr.mxu0 0.0
      %217 = vmatpush1.msra.mxu0 0.0
      %218 = vmatprep.subr.mxu0 0.0
      %219 = vmatpush1.msra.mxu0 0.0
      %220 = vmatprep.subr.mxu0 0.0
      %221 = vmatpush1.msra.mxu0 0.0
      %222 = vmatprep.subr.mxu0 0.0
      %223 = vmatpush1.msra.mxu0 0.0
      %224 = vmatprep.subr.mxu0 0.0
      %225 = vmatpush1.msra.mxu0 0.0
      %226 = vmatprep.subr.mxu0 0.0
      %227 = vmatpush1.msra.mxu0 0.0
      %228 = vmatprep.mubr.f32.mxu0 0.0
      %229 = vmatmul.mubr.f32.gmra.mrb[0].mxu0 %v162
      %v230 = vpop.f32.mrb[0].mxu0
      %v231 = vadd.f32 %v159, %v230
      %v232 = vpop.f32.mrb[0].mxu0
      %233 = vdwg.mxu0
      %v234 = vmax.f32 %v231, 0.0
      %v235 = vld [vmem:[%s5] sm:$0xff]
      %v236 = vld [vmem:[%s5 + $0x8] sm:$0xff]
      %v237 = vld [vmem:[%s5 + $0x10] sm:$0xff]
      %v238 = vld [vmem:[%s5 + $0x18] sm:$0xff]
      %v239 = vld [vmem:[%s5 + $0x20] sm:$0xff]
      %v240 = vld [vmem:[%s5 + $0x28] sm:$0xff]
      %v241 = vld [vmem:[%s5 + $0x30] sm:$0xff]
      %v242 = vld [vmem:[%s5 + $0x38] sm:$0xff]
      %v243 = vld [vmem:[%s5 + $0x40] sm:$0xff]
      %v244 = vld [vmem:[%s5 + $0x48] sm:$0xff]
      %v245 = vld [vmem:[%s5 + $0x50] sm:$0xff]
      %v246 = vld [vmem:[%s5 + $0x58] sm:$0xff]
      %v247 = vld [vmem:[%s5 + $0x60] sm:$0xff]
      %v248 = vld [vmem:[%s5 + $0x68] sm:$0xff]
      %v249 = vld [vmem:[%s5 + $0x70] sm:$0xff]
      %v250 = vld [vmem:[%s5 + $0x78] sm:$0xff]
      %v251 = vld [vmem:[%s6] sm:$0x1]
      %v253 = vlaneseq
      %v254 = vshrl.u32 %v253, 7
      %v255 = vsub.s32 0, %v254
      %v256 = vrot.slane %v251, %v255
      %258 = vmatprep.subr.mxu0 0.0
      %259 = vmatpush1.msra.mxu0 %v235
      %260 = vmatprep.subr.mxu0 0.0
      %261 = vmatpush1.msra.mxu0 %v236
      %262 = vmatprep.subr.mxu0 0.0
      %263 = vmatpush1.msra.mxu0 %v237
      %264 = vmatprep.subr.mxu0 0.0
      %265 = vmatpush1.msra.mxu0 %v238
      %266 = vmatprep.subr.mxu0 0.0
      %267 = vmatpush1.msra.mxu0 %v239
      %268 = vmatprep.subr.mxu0 0.0
      %269 = vmatpush1.msra.mxu0 %v240
      %270 = vmatprep.subr.mxu0 0.0
      %271 = vmatpush1.msra.mxu0 %v241
      %272 = vmatprep.subr.mxu0 0.0
      %273 = vmatpush1.msra.mxu0 %v242
      %274 = vmatprep.subr.mxu0 0.0
      %275 = vmatpush1.msra.mxu0 %v243
      %276 = vmatprep.subr.mxu0 0.0
      %277 = vmatpush1.msra.mxu0 %v244
      %278 = vmatprep.subr.mxu0 0.0
      %279 = vmatpush1.msra.mxu0 %v245
      %280 = vmatprep.subr.mxu0 0.0
      %281 = vmatpush1.msra.mxu0 %v246
      %282 = vmatprep.subr.mxu0 0.0
      %283 = vmatpush1.msra.mxu0 %v247
      %284 = vmatprep.subr.mxu0 0.0
      %285 = vmatpush1.msra.mxu0 %v248
      %286 = vmatprep.subr.mxu0 0.0
      %287 = vmatpush1.msra.mxu0 %v249
      %288 = vmatprep.subr.mxu0 0.0
      %289 = vmatpush1.msra.mxu0 %v250
      %290 = vmatprep.subr.mxu0 0.0
      %291 = vmatpush1.msra.mxu0 0.0
      %292 = vmatprep.subr.mxu0 0.0
      %293 = vmatpush1.msra.mxu0 0.0
      %294 = vmatprep.subr.mxu0 0.0
      %295 = vmatpush1.msra.mxu0 0.0
      %296 = vmatprep.subr.mxu0 0.0
      %297 = vmatpush1.msra.mxu0 0.0
      %298 = vmatprep.subr.mxu0 0.0
      %299 = vmatpush1.msra.mxu0 0.0
      %300 = vmatprep.subr.mxu0 0.0
      %301 = vmatpush1.msra.mxu0 0.0
      %302 = vmatprep.subr.mxu0 0.0
      %303 = vmatpush1.msra.mxu0 0.0
      %304 = vmatprep.subr.mxu0 0.0
      %305 = vmatpush1.msra.mxu0 0.0
      %306 = vmatprep.subr.mxu0 0.0
      %307 = vmatpush1.msra.mxu0 0.0
      %308 = vmatprep.subr.mxu0 0.0
      %309 = vmatpush1.msra.mxu0 0.0
      %310 = vmatprep.subr.mxu0 0.0
      %311 = vmatpush1.msra.mxu0 0.0
      %312 = vmatprep.subr.mxu0 0.0
      %313 = vmatpush1.msra.mxu0 0.0
      %314 = vmatprep.subr.mxu0 0.0
      %315 = vmatpush1.msra.mxu0 0.0
      %316 = vmatprep.subr.mxu0 0.0
      %317 = vmatpush1.msra.mxu0 0.0
      %318 = vmatprep.subr.mxu0 0.0
      %319 = vmatpush1.msra.mxu0 0.0
      %320 = vmatprep.subr.mxu0 0.0
      %321 = vmatpush1.msra.mxu0 0.0
      %322 = vmatprep.mubr.f32.mxu0 0.0
      %323 = vmatmul.mubr.f32.gmra.mrb[0].mxu0 %v234
      %v324 = vpop.f32.mrb[0].mxu0
      %v325 = vadd.f32 %v256, %v324
      %v326 = vpop.f32.mrb[0].mxu0
      %327 = vdwg.mxu0
      %328 = vst [vmem:[#allocation3] sm:$0xff] %v325
    $region37: #{tpu_custom_call.1} parent=1 // pred_fallthru
      _
    // Predicated region
    $region38: #{tpu_custom_call.1} parent=1 // pred_check
      _
    $region39: #{tpu_custom_call.1} parent=1 // pred_check_branch
      %330 = sbr.rel (0) target = $region41
    $region40: #{tpu_custom_call.1} parent=1 // pred_region
      %s332 = ssub.s32 128, 128
      %333 = vsyncadd [#allocation4], %s332
      %s335 = sshll.u32 [#allocation3], 4
      %s336 = int_to_ptr.vmem [resolvable:$true] %s335
      %338 = dma.vmem_to_hbm [thread:$0]  %s336, 128, %s7, [#allocation4]
    $region41: #{tpu_custom_call.1} parent=1 // pred_fallthru
      _
    // Predicated region
    $region42: #{tpu_custom_call.1} parent=1 // pred_check
      _
    $region43: #{tpu_custom_call.1} parent=1 // pred_check_branch
      %340 = sbr.rel (0) target = $region45
    $region44: #{tpu_custom_call.1} parent=1 // pred_region
      %341 = dma.done [#allocation4], 128
    $region45: #{tpu_custom_call.1} parent=1 // pred_fallthru
      _
    %342 = vsyncpa [#allocation4], 1

</llo_original>
